<compile_context>
chip_gen: v5e
topology: v5e:2x2
jax: 0.10.0
libtpu: 0.0.40
codegen_flags: <defaults>
</compile_context>

<pallas_src>
from collections import OrderedDict

import numpy as np
import jax
import jax.numpy as jnp
from jax.experimental import pallas as pl
from jax.experimental.pallas import tpu as pltpu


_LANE = 128                      # vreg lane width
_MIN_CHUNK_WIDTH = 256           # coalesce small params up to >= this many lanes
                                 # (raise toward 512 if per-chunk DMA count binds on v5e)
_XLA_FALLBACK_BYTES = 1 << 20    # below this, plain XLA slicing beats a kernel launch
_DEFAULT_VMEM_CAP = 64 << 20     # conservative fallback capacity (v7x per-core VMEM)


def _sublane_multiple(itemsize: int) -> int:
    # f32 packs 8 rows per vreg, bf16 16, int8/fp8 32.
    return max(8, 32 // max(1, itemsize))


def _vmem_budget_and_limit():
    """Generation-aware VMEM sizing: ~70% of capacity as the tiling budget,
    ~80% (capped) as the scoped limit requested from the compiler."""
    try:
        cap = int(pltpu.get_tpu_info().vmem_capacity_bytes)
    except Exception:
        cap = _DEFAULT_VMEM_CAP
    return (7 * cap) // 10, min((8 * cap) // 10, 128 << 20)


def _pick_batch_tile(batch: int, flat: int, itemsize: int, budget: int) -> int:
    """Largest legal batch tile whose double-buffered input + output blocks fit
    the VMEM budget, capped so the grid has >= 2 steps whenever possible (so
    both v7x TensorCores get work; harmless on single-TC v5e/v6e)."""
    sub = _sublane_multiple(itemsize)
    denom = 4 * flat * itemsize          # (in + out blocks) x double buffering, per row
    tb = max(sub, (budget // max(denom, 1)) // sub * sub)
    if batch <= sub:
        return batch                     # block == full batch dim is always legal
    half = pl.cdiv(pl.cdiv(batch, 2), sub) * sub   # guarantees >= 2 grid steps
    return min(tb, half)


def _round_batch_tile(tb: int, batch: int, itemsize: int) -> int:
    """Clamp a caller-supplied batch tile to a legal value (a multiple of the
    dtype's sublane packing, or the full batch dim)."""
    sub = _sublane_multiple(itemsize)
    tb = max(1, int(tb))
    if tb >= batch:
        return batch
    tb = max(sub, (tb // sub) * sub)
    return batch if tb >= batch else tb


class ParametersGroup:
    """JAX/Pallas port of the PyTorch ParametersGroup GenModule."""

    def __init__(self, shapes, shape_type=None, track=True):
        if not isinstance(shapes, OrderedDict):
            shapes = OrderedDict(shapes)
        if len(shapes) == 0:
            raise ValueError("shapes must not be empty")
        for n, s in shapes.items():
            if n is None or not isinstance(n, str):
                raise ValueError("shape name must be a string")
            if s is None or not isinstance(s, (list, tuple)) or len(s) == 0:
                raise ValueError("shape size must be a non-empty list/tuple")
            if any(v == 0 for v in s):
                raise ValueError("no shape dimension may be zero!")
        self.shapes = shapes
        self.shape_type = shape_type
        self._track = track

        flats = self.get_param_flats()
        offset = 0
        self.from_shapes = []
        for name, shape in self.shapes.items():
            f = flats[name]
            self.from_shapes.append((name, tuple(shape), offset, offset + f))
            offset += f

        # Chunk the flat axis into lane-aligned, lane-dense output slabs.
        # A chunk is closed only when its end column is a multiple of 128 (so
        # the next chunk starts lane-aligned) and it is at least
        # _MIN_CHUNK_WIDTH wide; the final chunk is clamped to P (never
        # overlap-read past the input block).  A chunk holding exactly one
        # parameter needs no wrapper re-slice (reshape only).
        chunks = []
        pending = None
        for name, shape, off, end in self.from_shapes:
            if pending is None:
                pending = dict(offset=off, size=0, params=[])
            pending['params'].append((name, shape, pending['size'], end - off))
            pending['size'] += end - off
            chunk_end = pending['offset'] + pending['size']
            if chunk_end % _LANE == 0 and pending['size'] >= _MIN_CHUNK_WIDTH:
                chunks.append(pending)
                pending = None
        if pending is not None:
            chunks.append(pending)
        self._chunks = chunks
        # TODO(synk): if a model ever has hundreds of chunks, split them across
        # several pallas_calls to bound the unrolled kernel body.

    # --- metadata helpers (identical semantics to the PyTorch module) ---
    def is_generated(self):
        return True

    def names(self):
        return list(self.shapes.keys())

    def get_shapes(self):
        return self.shapes

    def get_param_flats(self):
        ret = OrderedDict()
        for n, s in self.shapes.items():
            ret[n] = int(np.prod(s))
        return ret

    def single_flat_size(self):
        return sum(v for v in self.get_param_flats().values())

    def gen_initialized_params(self, key, dtype=jnp.float32, gain=1.0):
        """Deterministic synthetic init (xavier-normal-ish / uniform fallback)."""
        params = OrderedDict()
        for name, shape in self.shapes.items():
            key, sub = jax.random.split(key)
            if len(shape) >= 2:
                fan_in, fan_out = int(np.prod(shape[1:])), int(shape[0])
                std = gain * float(np.sqrt(2.0 / (fan_in + fan_out)))
                params[name] = std * jax.random.normal(sub, shape, dtype=dtype)
            else:
                params[name] = jax.random.uniform(
                    sub, shape, dtype=dtype, minval=-0.1, maxval=0.1)
        return params

    # --- reference (fallback) path: plain XLA slicing ---
    def _from_flat_xla(self, params):
        B = params.shape[0]
        rep = OrderedDict()
        for name, shape, fr, to in self.from_shapes:
            rep[name] = params[:, fr:to].reshape((B,) + shape)
        return rep

    # --- Pallas hot path: from_flat ---
    def from_flat(self, params, *, batch_tile=None, use_pallas=None):
        """params: [B, P] -> OrderedDict[name -> [B, *shape]].

        The partitioned copy runs in a batch-tiled Pallas kernel; tiny inputs
        or a P too large to keep a (tb, P) row block VMEM-resident fall back
        to plain XLA slicing (the kernel is pure bandwidth).
        """
        B, P = params.shape
        assert P == self.single_flat_size(), (P, self.single_flat_size())

        itemsize = jnp.dtype(params.dtype).itemsize
        budget, vmem_limit = _vmem_budget_and_limit()

        min_footprint = 4 * _sublane_multiple(itemsize) * P * itemsize
        fits_vmem = min_footprint <= budget
        if use_pallas is None:
            use_pallas = fits_vmem and (B * P * itemsize >= _XLA_FALLBACK_BYTES)
        if not fits_vmem:
            # TODO(synk): column-tile (chunk-group grid axis or one pallas_call
            # per chunk group) for hypernetworks whose per-row P overflows
            # VMEM; until then plain XLA slicing is the safe path.
            use_pallas = False
        if not use_pallas:
            return self._from_flat_xla(params)

        if batch_tile is not None:
            tb = _round_batch_tile(batch_tile, B, itemsize)
        else:
            tb = _pick_batch_tile(B, P, itemsize, budget)
        grid = (pl.cdiv(B, tb),)

        offsets = tuple(c['offset'] for c in self._chunks)
        sizes = tuple(c['size'] for c in self._chunks)

        def _slice_kernel(p_ref, *out_refs):
            # Chunk starts are multiples of 128 and widths are multiples of
            # 128 (except possibly the final chunk), so these are unmasked
            # lane-dense vector loads/stores.
            for o_ref, off, sz in zip(out_refs, offsets, sizes):
                o_ref[...] = p_ref[:, off:off + sz]

        out_shapes = tuple(
            jax.ShapeDtypeStruct((B, sz), params.dtype) for sz in sizes)
        out_specs = tuple(
            pl.BlockSpec((tb, sz), lambda i: (i, 0)) for sz in sizes)

        flat_chunks = pl.pallas_call(
            _slice_kernel,
            out_shape=out_shapes,
            grid=grid,
            in_specs=[pl.BlockSpec((tb, P), lambda i: (i, 0))],
            out_specs=out_specs,
            compiler_params=pltpu.CompilerParams(
                dimension_semantics=("parallel",),   # v7x: shard batch over both TCs
                vmem_limit_bytes=vmem_limit),
            cost_estimate=pl.CostEstimate(
                flops=0, transcendentals=0,
                bytes_accessed=2 * B * P * itemsize),
        )(params)

        if not isinstance(flat_chunks, (tuple, list)):
            flat_chunks = (flat_chunks,)

        rep = OrderedDict()
        for chunk, flat in zip(self._chunks, flat_chunks):
            if len(chunk['params']) == 1:
                name, shape, _, _ = chunk['params'][0]
                rep[name] = flat.reshape((B,) + shape)
            else:
                # Coalesced small params: split with cheap XLA slices.
                for name, shape, rel_off, sz in chunk['params']:
                    rep[name] = flat[:, rel_off:rel_off + sz].reshape((B,) + shape)
        return rep

    # --- GenModule plumbing ---
    def track_feature(self, feat):
        if self._track == 'detach':
            return jax.tree_util.tree_map(jax.lax.stop_gradient, feat)
        elif not self._track:
            return None
        return feat

    def _forward(self, viewed, x):
        # TODO(synk): ParametersGroup._forward is abstract in the PyTorch
        # reference (raises NotImplementedError); there is no compute to port.
        raise NotImplementedError(
            "_forward for ParametersGroup is ill-defined. Use a sub-class.")

    def forward(self, params, x):
        """Mirrors the PyTorch forward: view the batched flat params.

        Since `_forward` is abstract in the reference module, the viewed
        (reshaped) parameters are returned as the "feature" so the output is
        well defined; the from_flat hot path is the Pallas kernel above.
        """
        viewed = self.from_flat(params['self'])
        y = viewed  # TODO(synk): subclass-defined _forward(viewed, x) goes here.
        return (self.track_feature(y), y)


if __name__ == "__main__":
    key = jax.random.PRNGKey(0)

    # Small, module-consistent shapes: a linear-like weight plus two small
    # vectors (the small ones get coalesced into one lane-aligned chunk that
    # starts at column 512, a 128-multiple).
    shapes = OrderedDict([
        ('weight', (32, 16)),   # 512 flat -> its own lane-aligned chunk
        ('bias', (16,)),        # 16 flat  -> coalesced with 'scale'
        ('scale', (16,)),       # 16 flat
    ])
    group = ParametersGroup(shapes, track=True)

    B = 8                                # number of hyper-generated models
    P = group.single_flat_size()         # 544
    key, kp, kx = jax.random.split(key, 3)
    flat_params = jax.random.normal(kp, (B, P), dtype=jnp.float32)
    x = jax.random.normal(kx, (B, 8, 16), dtype=jnp.float32)  # unused by base forward

    # 1) Pallas kernel path (single batch tile), bit-exact vs reference slicing.
    viewed = group.from_flat(flat_params, use_pallas=True)
    jax.block_until_ready(viewed['weight'])
    ref = np.asarray(flat_params)
    np.testing.assert_array_equal(np.asarray(viewed['weight']),
                                  ref[:, 0:512].reshape(B, 32, 16))
    np.testing.assert_array_equal(np.asarray(viewed['bias']),
                                  ref[:, 512:528].reshape(B, 16))
    np.testing.assert_array_equal(np.asarray(viewed['scale']),
                                  ref[:, 528:544].reshape(B, 16))

    # 2) Batch-tiled grid path (3 grid steps, partial last tile).
    key, kp2 = jax.random.split(key)
    B2 = 20
    flat2 = jax.random.normal(kp2, (B2, P), dtype=jnp.float32)
    viewed2 = group.from_flat(flat2, batch_tile=8, use_pallas=True)
    jax.block_until_ready(viewed2['weight'])
    ref2 = np.asarray(flat2)
    np.testing.assert_array_equal(np.asarray(viewed2['weight']),
                                  ref2[:, 0:512].reshape(B2, 32, 16))
    np.testing.assert_array_equal(np.asarray(viewed2['bias']),
                                  ref2[:, 512:528].reshape(B2, 16))
    np.testing.assert_array_equal(np.asarray(viewed2['scale']),
                                  ref2[:, 528:544].reshape(B2, 16))

    # 3) Auto-picked tile: >= 2 grid steps so both v7x TensorCores get work.
    viewed3 = group.from_flat(flat2, use_pallas=True)
    jax.block_until_ready(viewed3['weight'])
    np.testing.assert_array_equal(np.asarray(viewed3['weight']),
                                  ref2[:, 0:512].reshape(B2, 32, 16))

    # 4) Module forward (auto heuristic; tiny inputs take the XLA fallback).
    tracked, y = group.forward({'self': flat_params}, x)
    jax.block_until_ready(y['weight'])
    np.testing.assert_array_equal(np.asarray(y['weight']),
                                  np.asarray(viewed['weight']))
    assert tracked is not None and tracked['weight'].shape == (B, 32, 16)

    print("KERNEL_OK")
</pallas_src>

<mosaic_0001>
module attributes {stable_mosaic.version = 11 : i64} {
  func.func @_slice_kernel(%arg0: i32, %arg1: memref<8x544xf32, #tpu.memory_space<vmem>>, %arg2: memref<8x512xf32, #tpu.memory_space<vmem>>, %arg3: memref<8x32xf32, #tpu.memory_space<vmem>>) attributes {dimension_semantics = [#tpu.dimension_semantics<parallel>], iteration_bounds = array<i64: 1>, scalar_prefetch = 0 : i64, scratch_operands = 0 : i64, tpu.core_type = #tpu.core_type<tc>, window_params = [{transform_indices = @transform_0, window_bounds = array<i64: 8, 544>}, {transform_indices = @transform_1, window_bounds = array<i64: 8, 512>}, {transform_indices = @transform_2, window_bounds = array<i64: 8, 32>}]} {
    %c0 = arith.constant 0 : index
    %c0_0 = arith.constant 0 : index
    %0 = vector.load %arg1[%c0, %c0_0] : memref<8x544xf32, #tpu.memory_space<vmem>>, vector<8x512xf32>
    %c0_1 = arith.constant 0 : index
    %c0_2 = arith.constant 0 : index
    %1 = vector.load %arg2[%c0_1, %c0_2] : memref<8x512xf32, #tpu.memory_space<vmem>>, vector<8x512xf32>
    tpu.vector_store %arg2[%c0_1, %c0_2], %0 {strides = array<i32>} : memref<8x512xf32, #tpu.memory_space<vmem>>, vector<8x512xf32>,
    %c0_3 = arith.constant 0 : index
    %c512 = arith.constant 512 : index
    %2 = vector.load %arg1[%c0_3, %c512] : memref<8x544xf32, #tpu.memory_space<vmem>>, vector<8x32xf32>
    %c0_4 = arith.constant 0 : index
    %c0_5 = arith.constant 0 : index
    %3 = vector.load %arg3[%c0_4, %c0_5] : memref<8x32xf32, #tpu.memory_space<vmem>>, vector<8x32xf32>
    tpu.vector_store %arg3[%c0_4, %c0_5], %2 {strides = array<i32>} : memref<8x32xf32, #tpu.memory_space<vmem>>, vector<8x32xf32>,
    return
  }
  func.func @transform_0(%arg0: i32) -> (i32, i32) {
    %c0_i32 = arith.constant 0 : i32
    %c0_i32_0 = arith.constant 0 : i32
    return %arg0, %c0_i32 : i32, i32
  }
  func.func @transform_1(%arg0: i32) -> (i32, i32) {
    %c0_i32 = arith.constant 0 : i32
    %c0_i32_0 = arith.constant 0 : i32
    return %arg0, %c0_i32 : i32, i32
  }
  func.func @transform_2(%arg0: i32) -> (i32, i32) {
    %c0_i32 = arith.constant 0 : i32
    %c0_i32_0 = arith.constant 0 : i32
    return %arg0, %c0_i32 : i32, i32
  }
}

</mosaic_0001>

<llo_original>
// kernel: tpu_custom_call.1
$region0: #{tpu_custom_call.1}
  #allocation0 [shape = 'u32[]', space=smem, size = 0x4, offset = 0x4, fixed_abs, tag = 'smem constant byte address 0x4 - core index']
  #allocation1 [shape = 'u32[72,128]{1,0:T(1,128)}', space=vmem, size = 0x9000, scoped, tag = 'internal scratch']
  %s0 = inlined_call_operand.hbm [shape: f32[8,544], index: 0, kind: input, shape index: {}]
  %s1 = inlined_call_operand.hbm [shape: f32[8,512], index: 1, kind: output, shape index: {0}]
  %s2 = inlined_call_operand.hbm [shape: f32[8,32], index: 2, kind: output, shape index: {1}]
  %3 = xla_tuple %s1, %s2
  %s4 = sld [smem:[#allocation0]]
  $region26: #{tpu_custom_call.1} parent=0
    _
  %s6 = ssub.s32 1, %s4
  %s7 = scalar_select 0, %s6, %s4
  $region1: #{tpu_custom_call.1} parent=0
    #allocation2 [shape = 'u8[20480]{0}', space=vmem, size = 0x5000, scoped, tag = 'input window, operand 0, single buffered']
    #allocation3 [shape = 's32[1]{0}', space=sflag, size = 0x4, scoped, tag = 'scoped memory for tpu_custom_call.1']
    #allocation4 [shape = 's32[1]{0}', space=sflag, size = 0x4, scoped, tag = 'scoped memory for tpu_custom_call.1']
    #allocation5 [shape = 'u8[16384]{0}', space=vmem, size = 0x4000, scoped, tag = 'output window, operand 0, single buffered']
    #allocation6 [shape = 'u8[4096]{0}', space=vmem, size = 0x1000, scoped, tag = 'output window, operand 1, single buffered']
    #allocation7 [shape = 's32[1]{0}', space=sflag, size = 0x4, scoped, tag = 'scoped memory for tpu_custom_call.1']
    %8 = vsyncpa [#allocation3], 0
    %9 = vsyncpa [#allocation4], 0
    %10 = vsyncpa [#allocation7], 0
    // Predicated region
    $region2: #{tpu_custom_call.1} parent=1 // pred_check
      _
    $region3: #{tpu_custom_call.1} parent=1 // pred_check_branch
      %12 = sbr.rel (0) target = $region5
    $region4: #{tpu_custom_call.1} parent=1 // pred_region
      %14 = vsyncadd [#allocation3], 0
      %s16 = sshll.u32 %s0, 4
      %s17 = int_to_ptr.hbm [resolvable:$true] %s16
      %s18 = sshll.u32 [#allocation2], 4
      %s19 = int_to_ptr.vmem [resolvable:$true] %s18
      %21 = dma.hbm_to_vmem [thread:$0]  %s17, 640, %s19, [#allocation3]
    $region5: #{tpu_custom_call.1} parent=1 // pred_fallthru
      _
    // Predicated region
    $region6: #{tpu_custom_call.1} parent=1 // pred_check
      _
    $region7: #{tpu_custom_call.1} parent=1 // pred_check_branch
      %23 = sbr.rel (0) target = $region9
    $region8: #{tpu_custom_call.1} parent=1 // pred_region
      %25 = dma.done [#allocation3], 640
    $region9: #{tpu_custom_call.1} parent=1 // pred_fallthru
      _
    %v26 = vld [vmem:[#allocation2] sm:$0xff]
    %v27 = vld [vmem:[#allocation2 + $0x8] sm:$0xff]
    %v28 = vld [vmem:[#allocation2 + $0x10] sm:$0xff]
    %v29 = vld [vmem:[#allocation2 + $0x18] sm:$0xff]
    %30 = vst [vmem:[#allocation5] sm:$0xff] %v26
    %31 = vst [vmem:[#allocation5 + $0x8] sm:$0xff] %v27
    %32 = vst [vmem:[#allocation5 + $0x10] sm:$0xff] %v28
    %33 = vst [vmem:[#allocation5 + $0x18] sm:$0xff] %v29
    %v34 = vld [vmem:[#allocation2 + $0x20] sm:$0xff]
    %vm35 = vcmask 261120
    %36 = vst.msk [vmem:[#allocation6] sm:$0xff] %vm35, %v34
    // Predicated region
    $region10: #{tpu_custom_call.1} parent=1 // pred_check
      _
    $region11: #{tpu_custom_call.1} parent=1 // pred_check_branch
      %38 = sbr.rel (0) target = $region13
    $region12: #{tpu_custom_call.1} parent=1 // pred_region
      %40 = vsyncadd [#allocation4], 0
      %s42 = sshll.u32 [#allocation5], 4
      %s43 = int_to_ptr.vmem [resolvable:$true] %s42
      %s44 = sshll.u32 %s1, 4
      %s45 = int_to_ptr.hbm [resolvable:$true] %s44
      %47 = dma.vmem_to_hbm [thread:$0]  %s43, 512, %s45, [#allocation4]
    $region13: #{tpu_custom_call.1} parent=1 // pred_fallthru
      _
    // Predicated region
    $region14: #{tpu_custom_call.1} parent=1 // pred_check
      _
    $region15: #{tpu_custom_call.1} parent=1 // pred_check_branch
      %49 = sbr.rel (0) target = $region17
    $region16: #{tpu_custom_call.1} parent=1 // pred_region
      %51 = vsyncadd [#allocation7], 0
      %s53 = sshll.u32 [#allocation6], 4
      %s54 = int_to_ptr.vmem [resolvable:$true] %s53
      %s55 = sshll.u32 %s2, 4
      %s56 = int_to_ptr.hbm [resolvable:$true] %s55
      %58 = dma.vmem_to_hbm [thread:$0]  %s54, 128, %s56, [#allocation7]
    $region17: #{tpu_custom_call.1} parent=1 // pred_fallthru
      _
    // Predicated region
    $region18: #{tpu_custom_call.1} parent=1 // pred_check
      _
    $region19: #{tpu_custom_call.1} parent=1 // pred_check_branch
      %60 = sbr.rel (0) target = $region21
    $region20: #{tpu_custom_call.1} parent=1 // pred_region
      %62 = dma.done [#allocation4], 512
    $region21: #{tpu_custom_call.1} parent=1 // pred_fallthru
      _
    // Predicated region
    $region22: #{tpu_custom_call.1} parent=1 // pred_check
      _
    $region23: #{tpu_custom_call.1} parent=1 // pred_check_branch
      %64 = sbr.rel (0) target = $region25
    $region24: #{tpu_custom_call.1} parent=1 // pred_region
      %66 = dma.done [#allocation7], 128
    $region25: #{tpu_custom_call.1} parent=1 // pred_fallthru
      _
    %67 = vsyncpa [#allocation3], 1
    %68 = vsyncpa [#allocation4], 1
    %69 = vsyncpa [#allocation7], 1

</llo_original>
